<compile_context>
chip_gen: v5e
topology: v5e:2x2
jax: 0.10.0
libtpu: 0.0.40
codegen_flags: <defaults>
</compile_context>

<pallas_src>
import jax
import jax.numpy as jnp
from jax.experimental import pallas as pl
from jax.experimental.pallas import tpu as pltpu


def _round_up(n, m):
    return ((n + m - 1) // m) * m


# ----------------------------------------------------------------------------
# Kernel: one batch tile per grid step.
# ----------------------------------------------------------------------------
def _actor_kernel(x_ref, wih0_ref, b0_ref, wih1_ref, b1_ref,
                  fcw_ref, fcb_ref, ln_g_ref, ln_b_ref,
                  muw_ref, mub_ref, out_ref):
    H = wih1_ref.shape[0]              # wih1_T is [H, 4H]

    x = x_ref[...]                     # (TB, Ip) bf16, zero-padded features

    # ---- LSTM layer 0 (single timestep, h0 = c0 = 0) ------------------------
    # gates = x @ W_ih0^T + (b_ih0 + b_hh0); PyTorch gate order [i, f, g, o].
    # The "g" columns/bias were pre-scaled by 2 => tanh(g) = 2*sigmoid(2g) - 1,
    # so a single sigmoid over the full (TB, 4H) vector covers i, g and o.
    g0 = jnp.dot(x, wih0_ref[...], preferred_element_type=jnp.float32) + b0_ref[...]
    s0 = jax.nn.sigmoid(g0)
    c0 = s0[:, 0 * H:1 * H] * (2.0 * s0[:, 2 * H:3 * H] - 1.0)   # i * tanh(g), c_prev == 0
    h0 = s0[:, 3 * H:4 * H] * jnp.tanh(c0)                       # o * tanh(c)

    # ---- LSTM layer 1 (dropout between layers is a no-op at inference) ------
    g1 = jnp.dot(h0.astype(wih1_ref.dtype), wih1_ref[...],
                 preferred_element_type=jnp.float32) + b1_ref[...]
    s1 = jax.nn.sigmoid(g1)
    c1 = s1[:, 0 * H:1 * H] * (2.0 * s1[:, 2 * H:3 * H] - 1.0)
    h1 = s1[:, 3 * H:4 * H] * jnp.tanh(c1)       # == final_hidden_state[-1]

    # ---- fc -> LayerNorm -> ReLU (f32 math) ----------------------------------
    y = jnp.dot(h1.astype(fcw_ref.dtype), fcw_ref[...],
                preferred_element_type=jnp.float32) + fcb_ref[...]
    mean = jnp.mean(y, axis=-1, keepdims=True)
    var = jnp.mean((y - mean) ** 2, axis=-1, keepdims=True)      # biased var (nn.LayerNorm)
    y = (y - mean) * jax.lax.rsqrt(var + 1e-5)
    y = y * ln_g_ref[...] + ln_b_ref[...]
    y = jnp.maximum(y, 0.0)

    # ---- mu head (lane-padded to 128): tanh(.) + 1 ---------------------------
    z = jnp.dot(y.astype(muw_ref.dtype), muw_ref[...],
                preferred_element_type=jnp.float32) + mub_ref[...]
    out_ref[...] = jnp.tanh(z) + 1.0


# ----------------------------------------------------------------------------
# Wrapper: batch grid + lane-dense padding.
# ----------------------------------------------------------------------------
def actor_forward(x, kparams, *, tb_max=512):
    """x: (B, input_size) f32. Returns (B, n_actions) f32."""
    B, I = x.shape
    A = int(kparams["n_actions"])
    Ip = kparams["wih0_T"].shape[0]        # input features padded to 128 lanes
    OP = kparams["mu_w_T"].shape[1]        # output lanes padded to 128
    H4 = kparams["wih0_T"].shape[1]
    H = kparams["wih1_T"].shape[0]
    F = kparams["fc_w_T"].shape[1]

    # Batch tile: multiple of 8 sublanes, capped (fits scoped VMEM on v5e/v6e/v7x).
    TB = min(tb_max, max(8, _round_up(B, 8)))
    B_pad = _round_up(B, TB)
    grid = (B_pad // TB,)

    # Zero-pad batch rows and feature lanes (extra rows/cols discarded below).
    x_p = jnp.zeros((B_pad, Ip), jnp.bfloat16).at[:B, :I].set(x.astype(jnp.bfloat16))

    param_order = ("wih0_T", "b0", "wih1_T", "b1",
                   "fc_w_T", "fc_b", "ln_g", "ln_b", "mu_w_T", "mu_b")
    params = [kparams[k] for k in param_order]

    x_spec = pl.BlockSpec((TB, Ip), lambda b: (b, 0))
    # Weights/biases: single full block, constant index => fetched once, reused.
    w_specs = [pl.BlockSpec(p.shape, lambda b: (0, 0)) for p in params]
    out_spec = pl.BlockSpec((TB, OP), lambda b: (b, 0))

    param_bytes = sum(int(p.size) * p.dtype.itemsize for p in params)
    cost = pl.CostEstimate(
        flops=2 * B_pad * (Ip * H4 + H * H4 + H * F + F * OP),
        transcendentals=B_pad * (2 * (H4 + H) + OP + 1),
        bytes_accessed=int(x_p.size) * 2 + B_pad * OP * 4 + param_bytes,
    )

    out_padded = pl.pallas_call(
        _actor_kernel,
        out_shape=jax.ShapeDtypeStruct((B_pad, OP), jnp.float32),
        grid=grid,
        in_specs=[x_spec] + w_specs,
        out_specs=out_spec,
        compiler_params=pltpu.CompilerParams(
            dimension_semantics=("parallel",),
            vmem_limit_bytes=32 * 1024 * 1024,
        ),
        cost_estimate=cost,
    )(x_p, *params)

    return out_padded[:B, :A]


# ----------------------------------------------------------------------------
# Parameter construction (PyTorch-style raw params) + kernel-format packing.
# ----------------------------------------------------------------------------
def init_raw_params(key, n_actions, lstm_size, fc_size):
    """Synthetic init mirroring the module's __init__ (W_hh never influences the
    forward pass since h0 == 0, so it is not materialized; its bias IS kept)."""
    I, H, F = n_actions * 8 + 1, lstm_size, fc_size
    ks = jax.random.split(key, 6)

    def xavier(k, shape):                          # nn.init.xavier_uniform_
        fan_out, fan_in = shape
        lim = (6.0 / (fan_in + fan_out)) ** 0.5
        return jax.random.uniform(k, shape, jnp.float32, -lim, lim)

    bias = jnp.zeros((4 * H,), jnp.float32).at[H:2 * H].set(1.0)   # forget gate = 1
    f1 = 0.003
    lim_mu = 1.0 / (F ** 0.5)
    return dict(
        wih0=xavier(ks[0], (4 * H, I)), wih1=xavier(ks[1], (4 * H, H)),
        b_ih0=bias, b_hh0=bias, b_ih1=bias, b_hh1=bias,
        fc_w=jax.random.uniform(ks[2], (F, H), jnp.float32, -f1, f1),
        fc_b=jax.random.uniform(ks[3], (F,), jnp.float32, -f1, f1),
        ln_g=jnp.ones((F,), jnp.float32), ln_b=jnp.zeros((F,), jnp.float32),
        mu_w=jax.random.uniform(ks[4], (n_actions, F), jnp.float32, -lim_mu, lim_mu),
        mu_b=jax.random.uniform(ks[5], (n_actions,), jnp.float32, -lim_mu, lim_mu),
    )


def prepare_params(raw, n_actions):
    """Pack raw PyTorch-layout params into kernel layout:
       transpose to [in, out], pad to 128 lanes, fold b_ih+b_hh, pre-scale the
       candidate-gate ("g") columns by 2 (enables the single-sigmoid gate trick),
       and cast weight matrices to bf16."""
    H = raw["wih0"].shape[0] // 4
    I = raw["wih0"].shape[1]
    F = raw["fc_w"].shape[0]
    Ip = _round_up(I, 128)
    OP = _round_up(n_actions, 128)

    def scale_g(a4h):                              # scale rows [2H:3H] of a (4H, ...) array
        return a4h.at[2 * H:3 * H].multiply(2.0)

    wih0 = scale_g(raw["wih0"])                    # (4H, I)
    wih1 = scale_g(raw["wih1"])                    # (4H, H)
    b0 = scale_g(raw["b_ih0"] + raw["b_hh0"]).reshape(1, 4 * H)
    b1 = scale_g(raw["b_ih1"] + raw["b_hh1"]).reshape(1, 4 * H)

    wih0_T = jnp.zeros((Ip, 4 * H), jnp.bfloat16).at[:I].set(wih0.T.astype(jnp.bfloat16))
    wih1_T = wih1.T.astype(jnp.bfloat16)           # (H, 4H)
    fc_w_T = raw["fc_w"].T.astype(jnp.bfloat16)    # (H, F)
    mu_w_T = jnp.zeros((F, OP), jnp.bfloat16).at[:, :n_actions].set(
        raw["mu_w"].T.astype(jnp.bfloat16))
    mu_b = jnp.zeros((1, OP), jnp.float32).at[0, :n_actions].set(raw["mu_b"])

    return dict(
        n_actions=n_actions,
        wih0_T=wih0_T, b0=b0, wih1_T=wih1_T, b1=b1,
        fc_w_T=fc_w_T, fc_b=raw["fc_b"].reshape(1, F),
        ln_g=raw["ln_g"].reshape(1, F), ln_b=raw["ln_b"].reshape(1, F),
        mu_w_T=mu_w_T, mu_b=mu_b,
    )


def reference_forward(x, raw):
    """Pure-JAX f32 reference mirroring the PyTorch forward (inference)."""
    H = raw["wih0"].shape[0] // 4

    def cell(xin, w_ih, b_ih, b_hh):
        g = xin @ w_ih.T + b_ih + b_hh             # W_hh @ h0 == 0
        c = jax.nn.sigmoid(g[:, :H]) * jnp.tanh(g[:, 2 * H:3 * H])
        return jax.nn.sigmoid(g[:, 3 * H:]) * jnp.tanh(c)

    h0 = cell(x, raw["wih0"], raw["b_ih0"], raw["b_hh0"])
    h1 = cell(h0, raw["wih1"], raw["b_ih1"], raw["b_hh1"])
    y = h1 @ raw["fc_w"].T + raw["fc_b"]
    mean = y.mean(-1, keepdims=True)
    var = ((y - mean) ** 2).mean(-1, keepdims=True)
    y = (y - mean) * jax.lax.rsqrt(var + 1e-5) * raw["ln_g"] + raw["ln_b"]
    y = jnp.maximum(y, 0.0)
    return jnp.tanh(y @ raw["mu_w"].T + raw["mu_b"]) + 1.0


if __name__ == "__main__":
    n_actions, lstm_size, fc_size = 4, 32, 32
    batch = 2
    input_size = n_actions * 8 + 1                 # 33

    key = jax.random.PRNGKey(0)
    kx, kp = jax.random.split(key)
    raw = init_raw_params(kp, n_actions, lstm_size, fc_size)
    kparams = prepare_params(raw, n_actions)
    x = jax.random.normal(kx, (batch, input_size), jnp.float32)

    out = actor_forward(x, kparams)
    jax.block_until_ready(out)

    assert out.shape == (batch, n_actions)
    assert bool(jnp.all(jnp.isfinite(out)))
    assert bool(jnp.all(out >= 0.0)) and bool(jnp.all(out <= 2.0))   # tanh(.)+1 range

    ref = reference_forward(x, raw)                # f32 reference (bf16 weights in kernel)
    assert bool(jnp.allclose(out, ref, atol=0.1)), (out, ref)

    print("KERNEL_OK")
</pallas_src>

<mosaic_0001>
module attributes {stable_mosaic.version = 11 : i64} {
  func.func @_actor_kernel(%arg0: i32, %arg1: memref<8x128xbf16, #tpu.memory_space<vmem>>, %arg2: memref<128x128xbf16, #tpu.memory_space<vmem>>, %arg3: memref<1x128xf32, #tpu.memory_space<vmem>>, %arg4: memref<32x128xbf16, #tpu.memory_space<vmem>>, %arg5: memref<1x128xf32, #tpu.memory_space<vmem>>, %arg6: memref<32x32xbf16, #tpu.memory_space<vmem>>, %arg7: memref<1x32xf32, #tpu.memory_space<vmem>>, %arg8: memref<1x32xf32, #tpu.memory_space<vmem>>, %arg9: memref<1x32xf32, #tpu.memory_space<vmem>>, %arg10: memref<32x128xbf16, #tpu.memory_space<vmem>>, %arg11: memref<1x128xf32, #tpu.memory_space<vmem>>, %arg12: memref<8x128xf32, #tpu.memory_space<vmem>>) attributes {dimension_semantics = [#tpu.dimension_semantics<parallel>], iteration_bounds = array<i64: 1>, scalar_prefetch = 0 : i64, scratch_operands = 0 : i64, tpu.core_type = #tpu.core_type<tc>, window_params = [{transform_indices = @transform_0, window_bounds = array<i64: 8, 128>}, {pipeline_mode = #tpu.pipeline_mode<synchronous>, transform_indices = @transform_1, window_bounds = array<i64: 128, 128>}, {pipeline_mode = #tpu.pipeline_mode<synchronous>, transform_indices = @transform_2, window_bounds = array<i64: 1, 128>}, {pipeline_mode = #tpu.pipeline_mode<synchronous>, transform_indices = @transform_3, window_bounds = array<i64: 32, 128>}, {pipeline_mode = #tpu.pipeline_mode<synchronous>, transform_indices = @transform_4, window_bounds = array<i64: 1, 128>}, {pipeline_mode = #tpu.pipeline_mode<synchronous>, transform_indices = @transform_5, window_bounds = array<i64: 32, 32>}, {pipeline_mode = #tpu.pipeline_mode<synchronous>, transform_indices = @transform_6, window_bounds = array<i64: 1, 32>}, {pipeline_mode = #tpu.pipeline_mode<synchronous>, transform_indices = @transform_7, window_bounds = array<i64: 1, 32>}, {pipeline_mode = #tpu.pipeline_mode<synchronous>, transform_indices = @transform_8, window_bounds = array<i64: 1, 32>}, {pipeline_mode = #tpu.pipeline_mode<synchronous>, transform_indices = @transform_9, window_bounds = array<i64: 32, 128>}, {pipeline_mode = #tpu.pipeline_mode<synchronous>, transform_indices = @transform_10, window_bounds = array<i64: 1, 128>}, {transform_indices = @transform_11, window_bounds = array<i64: 8, 128>}]} {
    %c0 = arith.constant 0 : index
    %c0_0 = arith.constant 0 : index
    %0 = vector.load %arg1[%c0, %c0_0] : memref<8x128xbf16, #tpu.memory_space<vmem>>, vector<8x128xbf16>
    %c0_1 = arith.constant 0 : index
    %c0_2 = arith.constant 0 : index
    %1 = vector.load %arg2[%c0_1, %c0_2] : memref<128x128xbf16, #tpu.memory_space<vmem>>, vector<128x128xbf16>
    %cst = arith.constant dense<0.000000e+00> : vector<8x128xf32>
    %2 = tpu.matmul %0, %1, %cst {dimension_numbers = #tpu.dot_dimension_numbers<[1], [0], [0], [1], [0, 0, 1, 1], [], []>} : vector<8x128xbf16>, vector<128x128xbf16>, vector<8x128xf32> -> vector<8x128xf32>
    %c0_3 = arith.constant 0 : index
    %c0_4 = arith.constant 0 : index
    %3 = vector.load %arg3[%c0_3, %c0_4] : memref<1x128xf32, #tpu.memory_space<vmem>>, vector<1x128xf32>
    %4 = vector.broadcast %3 : vector<1x128xf32> to vector<8x128xf32>
    %5 = arith.addf %2, %4 : vector<8x128xf32>
    %6 = arith.negf %5 : vector<8x128xf32>
    %7 = math.exp %6 : vector<8x128xf32>
    %cst_5 = arith.constant 1.000000e+00 : f32
    %8 = vector.broadcast %cst_5 : f32 to vector<8x128xf32>
    %9 = arith.addf %8, %7 : vector<8x128xf32>
    %10 = arith.divf %8, %9 : vector<8x128xf32>
    %11 = vector.extract_strided_slice %10 {offsets = [0, 0], sizes = [8, 32], strides = [1, 1]} : vector<8x128xf32> to vector<8x32xf32>
    %12 = vector.extract_strided_slice %10 {offsets = [0, 64], sizes = [8, 32], strides = [1, 1]} : vector<8x128xf32> to vector<8x32xf32>
    %cst_6 = arith.constant 2.000000e+00 : f32
    %13 = vector.broadcast %cst_6 : f32 to vector<8x32xf32>
    %14 = arith.mulf %13, %12 : vector<8x32xf32>
    %cst_7 = arith.constant 1.000000e+00 : f32
    %15 = vector.broadcast %cst_7 : f32 to vector<8x32xf32>
    %16 = arith.subf %14, %15 : vector<8x32xf32>
    %17 = arith.mulf %11, %16 : vector<8x32xf32>
    %18 = vector.extract_strided_slice %10 {offsets = [0, 96], sizes = [8, 32], strides = [1, 1]} : vector<8x128xf32> to vector<8x32xf32>
    %19 = math.tanh %17 : vector<8x32xf32>
    %20 = arith.mulf %18, %19 : vector<8x32xf32>
    %21 = arith.truncf %20 : vector<8x32xf32> to vector<8x32xbf16>
    %c0_8 = arith.constant 0 : index
    %c0_9 = arith.constant 0 : index
    %22 = vector.load %arg4[%c0_8, %c0_9] : memref<32x128xbf16, #tpu.memory_space<vmem>>, vector<32x128xbf16>
    %cst_10 = arith.constant dense<0.000000e+00> : vector<8x128xf32>
    %23 = tpu.matmul %21, %22, %cst_10 {dimension_numbers = #tpu.dot_dimension_numbers<[1], [0], [0], [1], [0, 0, 1, 1], [], []>} : vector<8x32xbf16>, vector<32x128xbf16>, vector<8x128xf32> -> vector<8x128xf32>
    %c0_11 = arith.constant 0 : index
    %c0_12 = arith.constant 0 : index
    %24 = vector.load %arg5[%c0_11, %c0_12] : memref<1x128xf32, #tpu.memory_space<vmem>>, vector<1x128xf32>
    %25 = vector.broadcast %24 : vector<1x128xf32> to vector<8x128xf32>
    %26 = arith.addf %23, %25 : vector<8x128xf32>
    %27 = arith.negf %26 : vector<8x128xf32>
    %28 = math.exp %27 : vector<8x128xf32>
    %cst_13 = arith.constant 1.000000e+00 : f32
    %29 = vector.broadcast %cst_13 : f32 to vector<8x128xf32>
    %30 = arith.addf %29, %28 : vector<8x128xf32>
    %31 = arith.divf %29, %30 : vector<8x128xf32>
    %32 = vector.extract_strided_slice %31 {offsets = [0, 0], sizes = [8, 32], strides = [1, 1]} : vector<8x128xf32> to vector<8x32xf32>
    %33 = vector.extract_strided_slice %31 {offsets = [0, 64], sizes = [8, 32], strides = [1, 1]} : vector<8x128xf32> to vector<8x32xf32>
    %cst_14 = arith.constant 2.000000e+00 : f32
    %34 = vector.broadcast %cst_14 : f32 to vector<8x32xf32>
    %35 = arith.mulf %34, %33 : vector<8x32xf32>
    %cst_15 = arith.constant 1.000000e+00 : f32
    %36 = vector.broadcast %cst_15 : f32 to vector<8x32xf32>
    %37 = arith.subf %35, %36 : vector<8x32xf32>
    %38 = arith.mulf %32, %37 : vector<8x32xf32>
    %39 = vector.extract_strided_slice %31 {offsets = [0, 96], sizes = [8, 32], strides = [1, 1]} : vector<8x128xf32> to vector<8x32xf32>
    %40 = math.tanh %38 : vector<8x32xf32>
    %41 = arith.mulf %39, %40 : vector<8x32xf32>
    %42 = arith.truncf %41 : vector<8x32xf32> to vector<8x32xbf16>
    %c0_16 = arith.constant 0 : index
    %c0_17 = arith.constant 0 : index
    %43 = vector.load %arg6[%c0_16, %c0_17] : memref<32x32xbf16, #tpu.memory_space<vmem>>, vector<32x32xbf16>
    %cst_18 = arith.constant dense<0.000000e+00> : vector<8x32xf32>
    %44 = tpu.matmul %42, %43, %cst_18 {dimension_numbers = #tpu.dot_dimension_numbers<[1], [0], [0], [1], [0, 0, 1, 1], [], []>} : vector<8x32xbf16>, vector<32x32xbf16>, vector<8x32xf32> -> vector<8x32xf32>
    %c0_19 = arith.constant 0 : index
    %c0_20 = arith.constant 0 : index
    %45 = vector.load %arg7[%c0_19, %c0_20] : memref<1x32xf32, #tpu.memory_space<vmem>>, vector<1x32xf32>
    %46 = vector.broadcast %45 : vector<1x32xf32> to vector<8x32xf32>
    %47 = arith.addf %44, %46 : vector<8x32xf32>
    %cst_21 = arith.constant dense<0.000000e+00> : vector<8xf32>
    %48 = vector.multi_reduction <add>, %47, %cst_21 [1] : vector<8x32xf32> to vector<8xf32>
    %49 = vector.shape_cast %48 : vector<8xf32> to vector<8x1xf32>
    %cst_22 = arith.constant 3.200000e+01 : f32
    %50 = vector.broadcast %cst_22 : f32 to vector<8x1xf32>
    %51 = arith.divf %49, %50 : vector<8x1xf32>
    %52 = vector.broadcast %51 : vector<8x1xf32> to vector<8x32xf32>
    %53 = arith.subf %47, %52 : vector<8x32xf32>
    %54 = arith.mulf %53, %53 : vector<8x32xf32>
    %cst_23 = arith.constant dense<0.000000e+00> : vector<8xf32>
    %55 = vector.multi_reduction <add>, %54, %cst_23 [1] : vector<8x32xf32> to vector<8xf32>
    %56 = vector.shape_cast %55 : vector<8xf32> to vector<8x1xf32>
    %cst_24 = arith.constant 3.200000e+01 : f32
    %57 = vector.broadcast %cst_24 : f32 to vector<8x1xf32>
    %58 = arith.divf %56, %57 : vector<8x1xf32>
    %59 = vector.broadcast %51 : vector<8x1xf32> to vector<8x32xf32>
    %60 = arith.subf %47, %59 : vector<8x32xf32>
    %cst_25 = arith.constant 9.99999974E-6 : f32
    %61 = vector.broadcast %cst_25 : f32 to vector<8x1xf32>
    %62 = arith.addf %58, %61 : vector<8x1xf32>
    %63 = math.rsqrt %62 : vector<8x1xf32>
    %64 = vector.broadcast %63 : vector<8x1xf32> to vector<8x32xf32>
    %65 = arith.mulf %60, %64 : vector<8x32xf32>
    %c0_26 = arith.constant 0 : index
    %c0_27 = arith.constant 0 : index
    %66 = vector.load %arg8[%c0_26, %c0_27] : memref<1x32xf32, #tpu.memory_space<vmem>>, vector<1x32xf32>
    %67 = vector.broadcast %66 : vector<1x32xf32> to vector<8x32xf32>
    %68 = arith.mulf %65, %67 : vector<8x32xf32>
    %c0_28 = arith.constant 0 : index
    %c0_29 = arith.constant 0 : index
    %69 = vector.load %arg9[%c0_28, %c0_29] : memref<1x32xf32, #tpu.memory_space<vmem>>, vector<1x32xf32>
    %70 = vector.broadcast %69 : vector<1x32xf32> to vector<8x32xf32>
    %71 = arith.addf %68, %70 : vector<8x32xf32>
    %cst_30 = arith.constant 0.000000e+00 : f32
    %72 = vector.broadcast %cst_30 : f32 to vector<8x32xf32>
    %73 = arith.maximumf %71, %72 : vector<8x32xf32>
    %74 = arith.truncf %73 : vector<8x32xf32> to vector<8x32xbf16>
    %c0_31 = arith.constant 0 : index
    %c0_32 = arith.constant 0 : index
    %75 = vector.load %arg10[%c0_31, %c0_32] : memref<32x128xbf16, #tpu.memory_space<vmem>>, vector<32x128xbf16>
    %cst_33 = arith.constant dense<0.000000e+00> : vector<8x128xf32>
    %76 = tpu.matmul %74, %75, %cst_33 {dimension_numbers = #tpu.dot_dimension_numbers<[1], [0], [0], [1], [0, 0, 1, 1], [], []>} : vector<8x32xbf16>, vector<32x128xbf16>, vector<8x128xf32> -> vector<8x128xf32>
    %c0_34 = arith.constant 0 : index
    %c0_35 = arith.constant 0 : index
    %77 = vector.load %arg11[%c0_34, %c0_35] : memref<1x128xf32, #tpu.memory_space<vmem>>, vector<1x128xf32>
    %78 = vector.broadcast %77 : vector<1x128xf32> to vector<8x128xf32>
    %79 = arith.addf %76, %78 : vector<8x128xf32>
    %80 = math.tanh %79 : vector<8x128xf32>
    %cst_36 = arith.constant 1.000000e+00 : f32
    %81 = vector.broadcast %cst_36 : f32 to vector<8x128xf32>
    %82 = arith.addf %80, %81 : vector<8x128xf32>
    %c0_37 = arith.constant 0 : index
    %c0_38 = arith.constant 0 : index
    %83 = vector.load %arg12[%c0_37, %c0_38] : memref<8x128xf32, #tpu.memory_space<vmem>>, vector<8x128xf32>
    tpu.vector_store %arg12[%c0_37, %c0_38], %82 {strides = array<i32>} : memref<8x128xf32, #tpu.memory_space<vmem>>, vector<8x128xf32>,
    return
  }
  func.func @transform_0(%arg0: i32) -> (i32, i32) {
    %c0_i32 = arith.constant 0 : i32
    %c0_i32_0 = arith.constant 0 : i32
    return %arg0, %c0_i32 : i32, i32
  }
  func.func @transform_1(%arg0: i32) -> (i32, i32) {
    %c0_i32 = arith.constant 0 : i32
    %c0_i32_0 = arith.constant 0 : i32
    %c0_i32_1 = arith.constant 0 : i32
    return %c0_i32, %c0_i32_0 : i32, i32
  }
  func.func @transform_2(%arg0: i32) -> (i32, i32) {
    %c0_i32 = arith.constant 0 : i32
    %c0_i32_0 = arith.constant 0 : i32
    %c0_i32_1 = arith.constant 0 : i32
    return %c0_i32, %c0_i32_0 : i32, i32
  }
  func.func @transform_3(%arg0: i32) -> (i32, i32) {
    %c0_i32 = arith.constant 0 : i32
    %c0_i32_0 = arith.constant 0 : i32
    %c0_i32_1 = arith.constant 0 : i32
    return %c0_i32, %c0_i32_0 : i32, i32
  }
  func.func @transform_4(%arg0: i32) -> (i32, i32) {
    %c0_i32 = arith.constant 0 : i32
    %c0_i32_0 = arith.constant 0 : i32
    %c0_i32_1 = arith.constant 0 : i32
    return %c0_i32, %c0_i32_0 : i32, i32
  }
  func.func @transform_5(%arg0: i32) -> (i32, i32) {
    %c0_i32 = arith.constant 0 : i32
    %c0_i32_0 = arith.constant 0 : i32
    %c0_i32_1 = arith.constant 0 : i32
    return %c0_i32, %c0_i32_0 : i32, i32
  }
  func.func @transform_6(%arg0: i32) -> (i32, i32) {
    %c0_i32 = arith.constant 0 : i32
    %c0_i32_0 = arith.constant 0 : i32
    %c0_i32_1 = arith.constant 0 : i32
    return %c0_i32, %c0_i32_0 : i32, i32
  }
  func.func @transform_7(%arg0: i32) -> (i32, i32) {
    %c0_i32 = arith.constant 0 : i32
    %c0_i32_0 = arith.constant 0 : i32
    %c0_i32_1 = arith.constant 0 : i32
    return %c0_i32, %c0_i32_0 : i32, i32
  }
  func.func @transform_8(%arg0: i32) -> (i32, i32) {
    %c0_i32 = arith.constant 0 : i32
    %c0_i32_0 = arith.constant 0 : i32
    %c0_i32_1 = arith.constant 0 : i32
    return %c0_i32, %c0_i32_0 : i32, i32
  }
  func.func @transform_9(%arg0: i32) -> (i32, i32) {
    %c0_i32 = arith.constant 0 : i32
    %c0_i32_0 = arith.constant 0 : i32
    %c0_i32_1 = arith.constant 0 : i32
    return %c0_i32, %c0_i32_0 : i32, i32
  }
  func.func @transform_10(%arg0: i32) -> (i32, i32) {
    %c0_i32 = arith.constant 0 : i32
    %c0_i32_0 = arith.constant 0 : i32
    %c0_i32_1 = arith.constant 0 : i32
    return %c0_i32, %c0_i32_0 : i32, i32
  }
  func.func @transform_11(%arg0: i32) -> (i32, i32) {
    %c0_i32 = arith.constant 0 : i32
    %c0_i32_0 = arith.constant 0 : i32
    return %arg0, %c0_i32 : i32, i32
  }
}

</mosaic_0001>

<llo_original>
// kernel: tpu_custom_call.1
$region0: #{tpu_custom_call.1}
  #allocation0 [shape = 'u32[]', space=smem, size = 0x4, offset = 0x4, fixed_abs, tag = 'smem constant byte address 0x4 - core index']
  #allocation1 [shape = 'u32[72,128]{1,0:T(1,128)}', space=vmem, size = 0x9000, scoped, tag = 'internal scratch']
  %s0 = inlined_call_operand.hbm [shape: bf16[8,128], index: 0, kind: input, shape index: {}]
  %s1 = inlined_call_operand.hbm [shape: bf16[128,128], index: 1, kind: input, shape index: {}]
  %s2 = inlined_call_operand.vmem [shape: f32[1,128], index: 2, kind: input, shape index: {}]
  %s3 = inlined_call_operand.hbm [shape: bf16[32,128], index: 3, kind: input, shape index: {}]
  %s4 = inlined_call_operand.vmem [shape: f32[1,128], index: 4, kind: input, shape index: {}]
  %s5 = inlined_call_operand.hbm [shape: bf16[32,32], index: 5, kind: input, shape index: {}]
  %s6 = inlined_call_operand.vmem [shape: f32[1,32], index: 6, kind: input, shape index: {}]
  %s7 = inlined_call_operand.vmem [shape: f32[1,32], index: 7, kind: input, shape index: {}]
  %s8 = inlined_call_operand.vmem [shape: f32[1,32], index: 8, kind: input, shape index: {}]
  %s9 = inlined_call_operand.hbm [shape: bf16[32,128], index: 9, kind: input, shape index: {}]
  %s10 = inlined_call_operand.vmem [shape: f32[1,128], index: 10, kind: input, shape index: {}]
  %s11 = inlined_call_operand.hbm [shape: f32[8,128], index: 11, kind: output, shape index: {}]
  %s12 = sld [smem:[#allocation0]]
  $region74: #{tpu_custom_call.1} parent=0
    _
  %s14 = ssub.s32 1, %s12
  %s15 = scalar_select 0, %s14, %s12
  $region1: #{tpu_custom_call.1} parent=0
    #allocation2 [shape = 'u8[2048]{0}', space=vmem, size = 0x800, scoped, tag = 'input window, operand 0, single buffered']
    #allocation3 [shape = 's32[1]{0}', space=sflag, size = 0x4, scoped, tag = 'scoped memory for tpu_custom_call.1']
    #allocation4 [shape = 's32[1]{0}', space=sflag, size = 0x4, scoped, tag = 'scoped memory for tpu_custom_call.1']
    #allocation5 [shape = 'u8[32768]{0}', space=vmem, size = 0x8000, scoped, tag = 'input window, operand 1, single buffered']
    #allocation6 [shape = 's32[1]{0}', space=sflag, size = 0x4, scoped, tag = 'scoped memory for tpu_custom_call.1']
    #allocation7 [shape = 'u8[8192]{0}', space=vmem, size = 0x2000, scoped, tag = 'input window, operand 3, single buffered']
    #allocation8 [shape = 'u8[8192]{0}', space=vmem, size = 0x2000, scoped, tag = 'input window, operand 5, single buffered']
    #allocation9 [shape = 's32[1]{0}', space=sflag, size = 0x4, scoped, tag = 'scoped memory for tpu_custom_call.1']
    #allocation10 [shape = 'u8[8192]{0}', space=vmem, size = 0x2000, scoped, tag = 'input window, operand 9, single buffered']
    #allocation11 [shape = 'u8[4096]{0}', space=vmem, size = 0x1000, scoped, tag = 'output window, operand 0, single buffered']
    %16 = vsyncpa [#allocation3], 0
    %17 = vsyncpa [#allocation6], 0
    %18 = vsyncpa [#allocation9], 0
    %19 = vsyncpa [#allocation4], 0
    // Predicated region
    $region2: #{tpu_custom_call.1} parent=1 // pred_check
      _
    $region3: #{tpu_custom_call.1} parent=1 // pred_check_branch
      %21 = sbr.rel (0) target = $region5
    $region4: #{tpu_custom_call.1} parent=1 // pred_region
      %23 = vsyncadd [#allocation3], 0
      %s25 = sshll.u32 %s0, 4
      %s26 = int_to_ptr.hbm [resolvable:$true] %s25
      %s27 = sshll.u32 [#allocation2], 4
      %s28 = int_to_ptr.vmem [resolvable:$true] %s27
      %30 = dma.hbm_to_vmem [thread:$0]  %s26, 64, %s28, [#allocation3]
    $region5: #{tpu_custom_call.1} parent=1 // pred_fallthru
      _
    // Predicated region
    $region6: #{tpu_custom_call.1} parent=1 // pred_check
      _
    $region7: #{tpu_custom_call.1} parent=1 // pred_check_branch
      %32 = sbr.rel (0) target = $region9
    $region8: #{tpu_custom_call.1} parent=1 // pred_region
      %34 = vsyncadd [#allocation6], 0
      %s35 = sshll.u32 %s1, 4
      %s36 = int_to_ptr.hbm [resolvable:$true] %s35
      %s37 = sshll.u32 [#allocation5], 4
      %s38 = int_to_ptr.vmem [resolvable:$true] %s37
      %43 = dma.hbm_to_vmem [thread:$0]  %s36, 1024, %s38, [#allocation6], 64, 64, 4
    $region9: #{tpu_custom_call.1} parent=1 // pred_fallthru
      _
    // Predicated region
    $region10: #{tpu_custom_call.1} parent=1 // pred_check
      _
    $region11: #{tpu_custom_call.1} parent=1 // pred_check_branch
      %45 = sbr.rel (0) target = $region13
    $region12: #{tpu_custom_call.1} parent=1 // pred_region
      _
    $region13: #{tpu_custom_call.1} parent=1 // pred_fallthru
      _
    // Predicated region
    $region14: #{tpu_custom_call.1} parent=1 // pred_check
      _
    $region15: #{tpu_custom_call.1} parent=1 // pred_check_branch
      %47 = sbr.rel (0) target = $region17
    $region16: #{tpu_custom_call.1} parent=1 // pred_region
      %49 = vsyncadd [#allocation6], 0
      %s50 = sshll.u32 %s3, 4
      %s51 = int_to_ptr.hbm [resolvable:$true] %s50
      %s52 = sshll.u32 [#allocation7], 4
      %s53 = int_to_ptr.vmem [resolvable:$true] %s52
      %58 = dma.hbm_to_vmem [thread:$0]  %s51, 256, %s53, [#allocation6], 64, 64, 4
    $region17: #{tpu_custom_call.1} parent=1 // pred_fallthru
      _
    // Predicated region
    $region18: #{tpu_custom_call.1} parent=1 // pred_check
      _
    $region19: #{tpu_custom_call.1} parent=1 // pred_check_branch
      %60 = sbr.rel (0) target = $region21
    $region20: #{tpu_custom_call.1} parent=1 // pred_region
      _
    $region21: #{tpu_custom_call.1} parent=1 // pred_fallthru
      _
    // Predicated region
    $region22: #{tpu_custom_call.1} parent=1 // pred_check
      _
    $region23: #{tpu_custom_call.1} parent=1 // pred_check_branch
      %62 = sbr.rel (0) target = $region25
    $region24: #{tpu_custom_call.1} parent=1 // pred_region
      %64 = vsyncadd [#allocation9], 0
      %s65 = sshll.u32 %s5, 4
      %s66 = int_to_ptr.hbm [resolvable:$true] %s65
      %s67 = sshll.u32 [#allocation8], 4
      %s68 = int_to_ptr.vmem [resolvable:$true] %s67
      %73 = dma.hbm_to_vmem [thread:$0]  %s66, 256, %s68, [#allocation9], 64, 64, 4
    $region25: #{tpu_custom_call.1} parent=1 // pred_fallthru
      _
    // Predicated region
    $region26: #{tpu_custom_call.1} parent=1 // pred_check
      _
    $region27: #{tpu_custom_call.1} parent=1 // pred_check_branch
      %75 = sbr.rel (0) target = $region29
    $region28: #{tpu_custom_call.1} parent=1 // pred_region
      _
    $region29: #{tpu_custom_call.1} parent=1 // pred_fallthru
      _
    // Predicated region
    $region30: #{tpu_custom_call.1} parent=1 // pred_check
      _
    $region31: #{tpu_custom_call.1} parent=1 // pred_check_branch
      %77 = sbr.rel (0) target = $region33
    $region32: #{tpu_custom_call.1} parent=1 // pred_region
      _
    $region33: #{tpu_custom_call.1} parent=1 // pred_fallthru
      _
    // Predicated region
    $region34: #{tpu_custom_call.1} parent=1 // pred_check
      _
    $region35: #{tpu_custom_call.1} parent=1 // pred_check_branch
      %79 = sbr.rel (0) target = $region37
    $region36: #{tpu_custom_call.1} parent=1 // pred_region
      _
    $region37: #{tpu_custom_call.1} parent=1 // pred_fallthru
      _
    // Predicated region
    $region38: #{tpu_custom_call.1} parent=1 // pred_check
      _
    $region39: #{tpu_custom_call.1} parent=1 // pred_check_branch
      %81 = sbr.rel (0) target = $region41
    $region40: #{tpu_custom_call.1} parent=1 // pred_region
      %83 = vsyncadd [#allocation9], 0
      %s84 = sshll.u32 %s9, 4
      %s85 = int_to_ptr.hbm [resolvable:$true] %s84
      %s86 = sshll.u32 [#allocation10], 4
      %s87 = int_to_ptr.vmem [resolvable:$true] %s86
      %92 = dma.hbm_to_vmem [thread:$0]  %s85, 256, %s87, [#allocation9], 64, 64, 4
    $region41: #{tpu_custom_call.1} parent=1 // pred_fallthru
      _
    // Predicated region
    $region42: #{tpu_custom_call.1} parent=1 // pred_check
      _
    $region43: #{tpu_custom_call.1} parent=1 // pred_check_branch
      %94 = sbr.rel (0) target = $region45
    $region44: #{tpu_custom_call.1} parent=1 // pred_region
      _
    $region45: #{tpu_custom_call.1} parent=1 // pred_fallthru
      _
    // Predicated region
    $region46: #{tpu_custom_call.1} parent=1 // pred_check
      _
    $region47: #{tpu_custom_call.1} parent=1 // pred_check_branch
      %96 = sbr.rel (0) target = $region49
    $region48: #{tpu_custom_call.1} parent=1 // pred_region
      %98 = dma.done [#allocation3], 64
    $region49: #{tpu_custom_call.1} parent=1 // pred_fallthru
      _
    // Predicated region
    $region50: #{tpu_custom_call.1} parent=1 // pred_check
      _
    $region51: #{tpu_custom_call.1} parent=1 // pred_check_branch
      %100 = sbr.rel (0) target = $region53
    $region52: #{tpu_custom_call.1} parent=1 // pred_region
      %102 = dma.done [#allocation6], 1024
    $region53: #{tpu_custom_call.1} parent=1 // pred_fallthru
      _
    // Predicated region
    $region54: #{tpu_custom_call.1} parent=1 // pred_check
      _
    $region55: #{tpu_custom_call.1} parent=1 // pred_check_branch
      %104 = sbr.rel (0) target = $region57
    $region56: #{tpu_custom_call.1} parent=1 // pred_region
      %106 = dma.done [#allocation6], 256
    $region57: #{tpu_custom_call.1} parent=1 // pred_fallthru
      _
    // Predicated region
    $region58: #{tpu_custom_call.1} parent=1 // pred_check
      _
    $region59: #{tpu_custom_call.1} parent=1 // pred_check_branch
      %108 = sbr.rel (0) target = $region61
    $region60: #{tpu_custom_call.1} parent=1 // pred_region
      %110 = dma.done [#allocation9], 256
    $region61: #{tpu_custom_call.1} parent=1 // pred_fallthru
      _
    // Predicated region
    $region62: #{tpu_custom_call.1} parent=1 // pred_check
      _
    $region63: #{tpu_custom_call.1} parent=1 // pred_check_branch
      %112 = sbr.rel (0) target = $region65
    $region64: #{tpu_custom_call.1} parent=1 // pred_region
      %114 = dma.done [#allocation9], 256
    $region65: #{tpu_custom_call.1} parent=1 // pred_fallthru
      _
    %v116 = vld [vmem:[#allocation2] sm:$0xf]
    %v117 = vld [vmem:[#allocation5] sm:$0xf]
    %v118 = vld [vmem:[#allocation5 + $0x4] sm:$0xf]
    %v119 = vld [vmem:[#allocation5 + $0x8] sm:$0xf]
    %v120 = vld [vmem:[#allocation5 + $0xc] sm:$0xf]
    %v121 = vld [vmem:[#allocation5 + $0x10] sm:$0xf]
    %v122 = vld [vmem:[#allocation5 + $0x14] sm:$0xf]
    %v123 = vld [vmem:[#allocation5 + $0x18] sm:$0xf]
    %v124 = vld [vmem:[#allocation5 + $0x1c] sm:$0xf]
    %v125 = vld [vmem:[#allocation5 + $0x20] sm:$0xf]
    %v126 = vld [vmem:[#allocation5 + $0x24] sm:$0xf]
    %v127 = vld [vmem:[#allocation5 + $0x28] sm:$0xf]
    %v128 = vld [vmem:[#allocation5 + $0x2c] sm:$0xf]
    %v129 = vld [vmem:[#allocation5 + $0x30] sm:$0xf]
    %v130 = vld [vmem:[#allocation5 + $0x34] sm:$0xf]
    %v131 = vld [vmem:[#allocation5 + $0x38] sm:$0xf]
    %v132 = vld [vmem:[#allocation5 + $0x3c] sm:$0xf]
    %v133 = vld [vmem:[%s2] sm:$0x1]
    %v135 = vperm.slane %v133, 0
    %v153 = vunpack.c.l.b16 %v117
    %v154 = vunpack.c.l.b16 %v118
    %v155 = vunpack.c.l.b16 %v119
    %v156 = vunpack.c.l.b16 %v120
    %v157 = vunpack.c.l.b16 %v121
    %v158 = vunpack.c.l.b16 %v122
    %v159 = vunpack.c.l.b16 %v123
    %v160 = vunpack.c.l.b16 %v124
    %v161 = vunpack.c.l.b16 %v125
    %v162 = vunpack.c.l.b16 %v126
    %v163 = vunpack.c.l.b16 %v127
    %v164 = vunpack.c.l.b16 %v128
    %v165 = vunpack.c.l.b16 %v129
    %v166 = vunpack.c.l.b16 %v130
    %v167 = vunpack.c.l.b16 %v131
    %v168 = vunpack.c.l.b16 %v132
    %v169 = vpack.c.b16 %v154, %v153
    %v170 = vpack.c.b16 %v156, %v155
    %v171 = vpack.c.b16 %v158, %v157
    %v172 = vpack.c.b16 %v160, %v159
    %v173 = vpack.c.b16 %v162, %v161
    %v174 = vpack.c.b16 %v164, %v163
    %v175 = vpack.c.b16 %v166, %v165
    %v176 = vpack.c.b16 %v168, %v167
    %185 = vmatpush.bf16.msra.mxu0 %v176
    %186 = vmatpush.bf16.msra.mxu0 %v175
    %187 = vmatpush.bf16.msra.mxu0 %v174
    %188 = vmatpush.bf16.msra.mxu0 %v173
    %189 = vmatpush.bf16.msra.mxu0 %v172
    %190 = vmatpush.bf16.msra.mxu0 %v171
    %191 = vmatpush.bf16.msra.mxu0 %v170
    %192 = vmatpush.bf16.msra.mxu0 %v169
    %193 = vmatmul.bf16.gmra.mxu0 %v116
    %v194 = vpop.f32.mrf.mxu0
    %v195 = vadd.f32 %v135, %v194
    %v196 = vpop.f32.mrf.mxu0
    %197 = vdwg.mxu0
    %v198 = vxor.u32 %v195, 2147483648
    %v199 = vmul.f32 %v198, 1.442695
    %v200 = vpow.pop %v199
    %v201 = vadd.f32 %v200, 1.0
    %v202 = vrcp.pop %v201
    %v203 = vmul.f32 %v201, %v202
    %v204 = vsub.f32 1.0, %v203
    %v205 = vmul.f32 %v202, %v204
    %v206 = vadd.f32 %v202, %v205
    %vm207 = vweird.f32 %v201
    %vm208 = vweird.f32 %v202
    %vm209 = vmor %vm207, %vm208
    %v210 = vsel %vm209, %v202, %v206
    %v211 = vand.u32 2147483647, %v201
    %vm212 = vcmp.eq.f32.partialorder %v211, 8.507059e+37
    %v213 = vand.u32 %v201, 2147483648
    %v214 = vor.u32 1.1754944e-38, %v213
    %v215 = vsel %vm212, %v214, %v210
    %v216 = vmul.f32 1.0, %v215
    %v217 = vmul.f32 %v216, 2.0
    %v218 = vsub.f32 %v217, 1.0
    %220 = vrot.lane.b32.xlu0 %v218, 64
    %v221 = vpop.permute.xlu0 %220
    %v223 = vmul.f32 %v216, %v221
    %v224 = vtanh.pop %v223
    %226 = vrot.lane.b32.xlu0 %v224, 96
    %v227 = vpop.permute.xlu0 %226
    %v229 = vmul.f32 %v216, %v227
    %v230 = vpack.c.bf16 %v229, %v229
    %v231 = vld [vmem:[#allocation7] sm:$0xf]
    %v232 = vld [vmem:[#allocation7 + $0x4] sm:$0xf]
    %v233 = vld [vmem:[#allocation7 + $0x8] sm:$0xf]
    %v234 = vld [vmem:[#allocation7 + $0xc] sm:$0xf]
    %v235 = vld [vmem:[%s4] sm:$0x1]
    %v237 = vperm.slane %v235, 0
    %240 = vrot.lane.b32.xlu0 %v230, 32
    %v241 = vpop.permute.xlu0 %240
    %v246 = vunpack.c.l.b16 %v231
    %v247 = vunpack.c.l.b16 %v232
    %v248 = vunpack.c.l.b16 %v233
    %v249 = vunpack.c.l.b16 %v234
    %v250 = vpack.c.b16 %v247, %v246
    %v251 = vpack.c.b16 %v249, %v248
    %vm254 = vcmask 261120
    %v256 = vsel %vm254, %v241, 0
    %258 = vmatpush.bf16.msra.mxu0 0
    %259 = vmatpush.bf16.msra.mxu0 0
    %260 = vmatpush.bf16.msra.mxu0 0
    %261 = vmatpush.bf16.msra.mxu0 0
    %262 = vmatpush.bf16.msra.mxu0 0
    %263 = vmatpush.bf16.msra.mxu0 0
    %264 = vmatpush.bf16.msra.mxu0 %v251
    %265 = vmatpush.bf16.msra.mxu0 %v250
    %266 = vmatmul.bf16.gmra.mxu0 %v256
    %v267 = vpop.f32.mrf.mxu0
    %v268 = vadd.f32 %v237, %v267
    %v269 = vpop.f32.mrf.mxu0
    %270 = vdwg.mxu0
    %v271 = vxor.u32 %v268, 2147483648
    %v272 = vmul.f32 %v271, 1.442695
    %v273 = vpow.pop %v272
    %v274 = vadd.f32 %v273, 1.0
    %v275 = vrcp.pop %v274
    %v276 = vmul.f32 %v274, %v275
    %v277 = vsub.f32 1.0, %v276
    %v278 = vmul.f32 %v275, %v277
    %v279 = vadd.f32 %v275, %v278
    %vm280 = vweird.f32 %v274
    %vm281 = vweird.f32 %v275
    %vm282 = vmor %vm280, %vm281
    %v283 = vsel %vm282, %v275, %v279
    %v284 = vand.u32 2147483647, %v274
    %vm285 = vcmp.eq.f32.partialorder %v284, 8.507059e+37
    %v286 = vand.u32 %v274, 2147483648
    %v287 = vor.u32 1.1754944e-38, %v286
    %v288 = vsel %vm285, %v287, %v283
    %v289 = vmul.f32 1.0, %v288
    %v290 = vmul.f32 %v289, 2.0
    %v291 = vsub.f32 %v290, 1.0
    %293 = vrot.lane.b32.xlu0 %v291, 64
    %v294 = vpop.permute.xlu0 %293
    %v296 = vmul.f32 %v289, %v294
    %v297 = vtanh.pop %v296
    %299 = vrot.lane.b32.xlu0 %v297, 96
    %v300 = vpop.permute.xlu0 %299
    %v302 = vmul.f32 %v289, %v300
    %v303 = vpack.c.bf16 %v302, %v302
    %v304 = vld [vmem:[#allocation8] sm:$0xf]
    %v305 = vld [vmem:[#allocation8 + $0x4] sm:$0xf]
    %v306 = vld [vmem:[#allocation8 + $0x8] sm:$0xf]
    %v307 = vld [vmem:[#allocation8 + $0xc] sm:$0xf]
    %v308 = vld [vmem:[%s6] sm:$0x1]
    %v310 = vperm.slane %v308, 0
    %313 = vrot.lane.b32.xlu0 %v303, 32
    %v314 = vpop.permute.xlu0 %313
    %v319 = vunpack.c.l.b16 %v304
    %v320 = vunpack.c.l.b16 %v305
    %v321 = vunpack.c.l.b16 %v306
    %v322 = vunpack.c.l.b16 %v307
    %v323 = vpack.c.b16 %v320, %v319
    %v324 = vpack.c.b16 %v322, %v321
    %v328 = vsel %vm254, %v314, 0
    %330 = vmatpush.bf16.msra.mxu0 0
    %331 = vmatpush.bf16.msra.mxu0 0
    %332 = vmatpush.bf16.msra.mxu0 0
    %333 = vmatpush.bf16.msra.mxu0 0
    %334 = vmatpush.bf16.msra.mxu0 0
    %335 = vmatpush.bf16.msra.mxu0 0
    %336 = vmatpush.bf16.msra.mxu0 %v324
    %337 = vmatpush.bf16.msra.mxu0 %v323
    %338 = vmatmul.bf16.gmra.mxu0 %v328
    %v339 = vpop.f32.mrf.mxu0
    %v340 = vadd.f32 %v310, %v339
    %v341 = vpop.f32.mrf.mxu0
    %342 = vdwg.mxu0
    %v343 = vsel %vm254, %v340, 0.0
    %344 = vadd.xlane.f32.xlu0 %v343
    %v345 = vpop.xlane.xlu0 %344
    %v346 = vrcp.pop 32.0
    %v347 = vmul.f32 32.0, %v346
    %v348 = vsub.f32 1.0, %v347
    %v349 = vmul.f32 %v346, %v348
    %v350 = vadd.f32 %v346, %v349
    %vm351 = vweird.f32 %v346
    %v352 = vsel %vm351, %v346, %v350
    %v353 = vmul.f32 %v345, %v352
    %v354 = vsub.f32 %v340, %v353
    %v355 = vmul.f32 %v354, %v354
    %v356 = vsel %vm254, %v355, 0.0
    %357 = vadd.xlane.f32.xlu0 %v356
    %v358 = vpop.xlane.xlu0 %357
    %v359 = vmul.f32 %v358, %v352
    %v360 = vadd.f32 %v359, 1e-05
    %v361 = vrsqrt.pop %v360
    %v362 = vmul.f32 %v361, %v360
    %v363 = vmul.f32 %v362, %v361
    %v364 = vmul.f32 0.5, %v363
    %v365 = vsub.f32 1.5, %v364
    %v366 = vmul.f32 %v361, %v365
    %vm367 = vweird.f32 %v360
    %vm368 = vweird.f32 %v361
    %vm369 = vmor %vm367, %vm368
    %v370 = vsel %vm369, %v361, %v366
    %v371 = vmul.f32 %v354, %v370
    %v372 = vld [vmem:[%s7] sm:$0x1]
    %v374 = vperm.slane %v372, 0
    %v376 = vmul.f32 %v371, %v374
    %v377 = vld [vmem:[%s8] sm:$0x1]
    %v379 = vperm.slane %v377, 0
    %v381 = vadd.f32 %v376, %v379
    %v382 = vmax.f32 %v381, 0.0
    %v383 = vpack.c.bf16 %v382, %v382
    %v384 = vld [vmem:[#allocation10] sm:$0xf]
    %v385 = vld [vmem:[#allocation10 + $0x4] sm:$0xf]
    %v386 = vld [vmem:[#allocation10 + $0x8] sm:$0xf]
    %v387 = vld [vmem:[#allocation10 + $0xc] sm:$0xf]
    %v388 = vld [vmem:[%s10] sm:$0x1]
    %v390 = vperm.slane %v388, 0
    %v396 = vunpack.c.l.b16 %v384
    %v397 = vunpack.c.l.b16 %v385
    %v398 = vunpack.c.l.b16 %v386
    %v399 = vunpack.c.l.b16 %v387
    %v400 = vpack.c.b16 %v397, %v396
    %v401 = vpack.c.b16 %v399, %v398
    %v405 = vsel %vm254, %v383, 0
    %407 = vmatpush.bf16.msra.mxu0 0
    %408 = vmatpush.bf16.msra.mxu0 0
    %409 = vmatpush.bf16.msra.mxu0 0
    %410 = vmatpush.bf16.msra.mxu0 0
    %411 = vmatpush.bf16.msra.mxu0 0
    %412 = vmatpush.bf16.msra.mxu0 0
    %413 = vmatpush.bf16.msra.mxu0 %v401
    %414 = vmatpush.bf16.msra.mxu0 %v400
    %415 = vmatmul.bf16.gmra.mxu0 %v405
    %v416 = vpop.f32.mrf.mxu0
    %v417 = vadd.f32 %v390, %v416
    %v418 = vpop.f32.mrf.mxu0
    %419 = vdwg.mxu0
    %v420 = vtanh.pop %v417
    %v421 = vadd.f32 %v420, 1.0
    %422 = vst [vmem:[#allocation11] sm:$0xff] %v421
    // Predicated region
    $region66: #{tpu_custom_call.1} parent=1 // pred_check
      _
    $region67: #{tpu_custom_call.1} parent=1 // pred_check_branch
      %424 = sbr.rel (0) target = $region69
    $region68: #{tpu_custom_call.1} parent=1 // pred_region
      %426 = vsyncadd [#allocation4], 0
      %s428 = sshll.u32 [#allocation11], 4
      %s429 = int_to_ptr.vmem [resolvable:$true] %s428
      %s430 = sshll.u32 %s11, 4
      %s431 = int_to_ptr.hbm [resolvable:$true] %s430
      %433 = dma.vmem_to_hbm [thread:$0]  %s429, 128, %s431, [#allocation4]
    $region69: #{tpu_custom_call.1} parent=1 // pred_fallthru
      _
    // Predicated region
    $region70: #{tpu_custom_call.1} parent=1 // pred_check
      _
    $region71: #{tpu_custom_call.1} parent=1 // pred_check_branch
      %435 = sbr.rel (0) target = $region73
    $region72: #{tpu_custom_call.1} parent=1 // pred_region
      %437 = dma.done [#allocation4], 128
    $region73: #{tpu_custom_call.1} parent=1 // pred_fallthru
      _
    %438 = vsyncpa [#allocation3], 1
    %439 = vsyncpa [#allocation6], 1
    %440 = vsyncpa [#allocation9], 1
    %441 = vsyncpa [#allocation4], 1

</llo_original>
